<compile_context>
chip_gen: v7x
topology: tpu7x:2x2x1
jax: 0.10.0
libtpu: 0.0.40
codegen_flags: <defaults>
</compile_context>

<pallas_src>
import functools
import math

import jax
import jax.numpy as jnp
from jax.experimental import pallas as pl
from jax.experimental.pallas import tpu as pltpu


# ---------------------------------------------------------------------------
# Kernels: one (TB, TC) tile of the flattened (B, S*D) problem.
#   seed_ref : SMEM scalar prefetch, shape (1,), int32
#   x_ref    : VMEM tile (TB, TC) of x.reshape(B, S*D)
#   pe_ref   : VMEM tile (1, TC) of pe[:S].reshape(1, S*D)
#   o_ref    : VMEM tile (TB, TC)
# ---------------------------------------------------------------------------


def _pe_dropout_hwprng_kernel(seed_ref, x_ref, pe_ref, o_ref, *, p):
    """Hardware-PRNG dropout path (real TPU): random bits in ~1 op per vreg."""
    y = x_ref[...] + pe_ref[...]                      # (TB, TC) + (1, TC) broadcast
    if p > 0.0:
        # Distinct stream per grid tile; the mask is tiling-dependent, which is
        # acceptable for dropout.
        pltpu.prng_seed(seed_ref[0], pl.program_id(0), pl.program_id(1))
        bits = pltpu.bitcast(pltpu.prng_random_bits(x_ref.shape), jnp.uint32)
        # Integer threshold compare on the top 24 bits -> P(drop) = p.
        keep = (bits >> jnp.uint32(8)) >= jnp.uint32(int(round(p * float(1 << 24))))
        scale = jnp.asarray(1.0 / (1.0 - p), dtype=y.dtype)
        y = jnp.where(keep, y * scale, jnp.zeros_like(y))
    o_ref[...] = y.astype(o_ref.dtype)


def _pe_dropout_hash_kernel(seed_ref, x_ref, pe_ref, o_ref, *, p, row_stride,
                            tb, tc, row_axis, col_axis):
    """Portable fallback: stateless 2-round counter hash (interpret / CPU safe)."""
    y = x_ref[...] + pe_ref[...]
    if p > 0.0:
        r_idx = pl.program_id(row_axis)
        c_idx = pl.program_id(col_axis)
        # Scalar tile base (scalar ALU, once per tile); per-element index is then
        # base + row*row_stride + col  (one vector mul + two adds).
        base = r_idx * (tb * row_stride) + c_idx * tc
        rows = jax.lax.broadcasted_iota(jnp.int32, x_ref.shape, 0)
        cols = jax.lax.broadcasted_iota(jnp.int32, x_ref.shape, 1)
        g = (base + rows * row_stride + cols).astype(jnp.uint32)
        s = seed_ref[0].astype(jnp.uint32)
        # Two rounds of multiply / xorshift are plenty for dropout and cost about
        # half the VALU ops of the previous splitmix hash.
        h = (g ^ (s * jnp.uint32(0x9E3779B9))) * jnp.uint32(0x7FEB352D)
        h = (h ^ (h >> jnp.uint32(15))) * jnp.uint32(0x846CA68B)
        h = h ^ (h >> jnp.uint32(16))
        keep = (h >> jnp.uint32(8)) >= jnp.uint32(int(round(p * float(1 << 24))))
        scale = jnp.asarray(1.0 / (1.0 - p), dtype=y.dtype)
        y = jnp.where(keep, y * scale, jnp.zeros_like(y))
    o_ref[...] = y.astype(o_ref.dtype)


# ---------------------------------------------------------------------------
# pe table (identical to the PyTorch __init__ construction)
# ---------------------------------------------------------------------------


def make_positional_encoding_table(max_len, d_model):
    position = jnp.arange(max_len, dtype=jnp.float32)[:, None]               # (max_len, 1)
    div_term = jnp.exp(
        jnp.arange(0, d_model, 2, dtype=jnp.float32) * (-math.log(10000.0) / d_model)
    )                                                                         # (d_model//2,)
    angles = position * div_term                                              # (max_len, d_model//2)
    pe = jnp.zeros((max_len, d_model), dtype=jnp.float32)
    pe = pe.at[:, 0::2].set(jnp.sin(angles))
    pe = pe.at[:, 1::2].set(jnp.cos(angles))
    return pe


# ---------------------------------------------------------------------------
# Tiling helpers: fixed aligned tiles + cdiv grids (edge blocks are padded).
# ---------------------------------------------------------------------------

_SUBLANE_PACK = {1: 32, 2: 16, 4: 8}   # itemsize -> second-minor alignment


def _pick_col_tile(cd, cap=16384):
    """Lane-dense column tile: full extent if small, else a 128-multiple <= cap."""
    if cd <= cap:
        return cd                     # full array extent is always a legal block dim
    return cap                        # multiple of 128; ragged edge block is padded


def _pick_row_tile(nrows, col_tile, itemsize, target_bytes=4 << 20):
    """Row tile aligned to the dtype's sublane packing, ~target_bytes per block."""
    pack = _SUBLANE_PACK.get(itemsize, 8)
    if nrows <= pack:
        return nrows                  # full extent is legal
    max_rows = max(pack, target_bytes // max(1, col_tile * itemsize))
    tb = min(nrows, max_rows)
    return max(pack, (tb // pack) * pack)


# ---------------------------------------------------------------------------
# Wrapper
# ---------------------------------------------------------------------------


def positional_encoding_forward(x, pe_table, *, dropout_p, seed, use_hw_prng=None):
    """x: (B, S, D); returns dropout(x + pe[:S]) with the same shape/dtype."""
    B, S, D = x.shape
    assert S <= pe_table.shape[0], "seq_len exceeds positional-encoding max_len"

    if use_hw_prng is None:
        # Hardware PRNG lowers via Mosaic on real TPUs; the stateless hash is the
        # portable fallback for CPU / interpret-mode checks.
        use_hw_prng = jax.default_backend() == "tpu"

    cd = S * D
    x2 = x.reshape(B, cd)
    pe2 = pe_table[:S].astype(x.dtype).reshape(1, cd)

    tc = _pick_col_tile(cd)
    tb = _pick_row_tile(B, tc, jnp.dtype(x.dtype).itemsize)
    n_c = pl.cdiv(cd, tc)
    n_b = pl.cdiv(B, tb)

    if n_c >= 2:
        # pe tile stays VMEM-resident across the inner batch axis; the outer
        # (megacore-sharded) axis has many blocks.
        grid = (n_c, n_b)
        col_axis, row_axis = 0, 1
        x_map = lambda c, b, seed: (b, c)
        pe_map = lambda c, b, seed: (0, c)
    else:
        # Degenerate column axis: put the batch axis outermost so the v7x
        # megacore still has blocks to shard.
        grid = (n_b, n_c)
        col_axis, row_axis = 1, 0
        x_map = lambda b, c, seed: (b, c)
        pe_map = lambda b, c, seed: (0, c)

    p = float(dropout_p)
    if use_hw_prng:
        kernel = functools.partial(_pe_dropout_hwprng_kernel, p=p)
    else:
        kernel = functools.partial(
            _pe_dropout_hash_kernel, p=p, row_stride=cd, tb=tb, tc=tc,
            row_axis=row_axis, col_axis=col_axis)

    seed_arr = jnp.asarray([seed], dtype=jnp.int32)

    out2 = pl.pallas_call(
        kernel,
        out_shape=jax.ShapeDtypeStruct((B, cd), x.dtype),
        grid_spec=pltpu.PrefetchScalarGridSpec(
            num_scalar_prefetch=1,
            grid=grid,
            in_specs=[
                pl.BlockSpec((tb, tc), x_map),
                pl.BlockSpec((1, tc), pe_map),
            ],
            out_specs=pl.BlockSpec((tb, tc), x_map),
        ),
        compiler_params=pltpu.CompilerParams(
            # blocks are fully independent
            dimension_semantics=("parallel", "parallel"),
            # ~4 MiB blocks, double buffered in+out -> raise the scoped default
            vmem_limit_bytes=48 << 20,
        ),
    )(seed_arr, x2, pe2)

    return out2.reshape(B, S, D)


if __name__ == "__main__":
    B, S, D = 2, 8, 32
    max_len = 5000
    dropout_p = 0.1

    key = jax.random.PRNGKey(0)
    x = jax.random.normal(key, (B, S, D), dtype=jnp.float32)

    pe_table = make_positional_encoding_table(max_len, D)
    ref = x + pe_table[:S][None, :, :]
    scaled = ref * (1.0 / (1.0 - dropout_p))

    # Train-mode path (dropout active); PRNG source auto-selected by backend.
    out = positional_encoding_forward(x, pe_table, dropout_p=dropout_p, seed=0)
    out = jax.block_until_ready(out)
    assert out.shape == (B, S, D)
    ok = jnp.all((out == 0.0) | (jnp.abs(out - scaled) < 1e-5))
    assert bool(ok), "dropout scaling mismatch (auto path)"

    # Portable hash path (always available) must also satisfy the dropout law.
    out_hash = positional_encoding_forward(
        x, pe_table, dropout_p=dropout_p, seed=0, use_hw_prng=False)
    out_hash = jax.block_until_ready(out_hash)
    ok2 = jnp.all((out_hash == 0.0) | (jnp.abs(out_hash - scaled) < 1e-5))
    assert bool(ok2), "dropout scaling mismatch (hash path)"

    # Eval-mode path (p=0) must equal x + pe exactly.
    out_eval = positional_encoding_forward(x, pe_table, dropout_p=0.0, seed=0)
    out_eval = jax.block_until_ready(out_eval)
    assert jnp.allclose(out_eval, ref, atol=1e-6), "pe-add mismatch"

    print("KERNEL_OK")
</pallas_src>

<mosaic_0001>
module attributes {stable_mosaic.version = 11 : i64} {
  func.func @_pe_dropout_hash_kernel(%arg0: i32, %arg1: i32, %arg2: memref<1xi32, #tpu.memory_space<smem>>, %arg3: memref<2x256xf32, #tpu.memory_space<vmem>>, %arg4: memref<1x256xf32, #tpu.memory_space<vmem>>, %arg5: memref<2x256xf32, #tpu.memory_space<vmem>>) attributes {dimension_semantics = [#tpu.dimension_semantics<parallel>, #tpu.dimension_semantics<parallel>], iteration_bounds = array<i64: 1, 1>, scalar_prefetch = 1 : i64, scratch_operands = 0 : i64, tpu.core_type = #tpu.core_type<tc>, window_params = [{transform_indices = @transform_0, window_bounds = array<i64: 2, 256>}, {transform_indices = @transform_1, window_bounds = array<i64: 1, 256>}, {transform_indices = @transform_2, window_bounds = array<i64: 2, 256>}]} {
    %c0 = arith.constant 0 : index
    %c0_0 = arith.constant 0 : index
    %0 = vector.load %arg3[%c0, %c0_0] : memref<2x256xf32, #tpu.memory_space<vmem>>, vector<2x256xf32>
    %c0_1 = arith.constant 0 : index
    %c0_2 = arith.constant 0 : index
    %1 = vector.load %arg4[%c0_1, %c0_2] : memref<1x256xf32, #tpu.memory_space<vmem>>, vector<1x256xf32>
    %2 = vector.broadcast %1 : vector<1x256xf32> to vector<2x256xf32>
    %3 = arith.addf %0, %2 : vector<2x256xf32>
    %c512_i32 = arith.constant 512 : i32
    %4 = arith.muli %arg0, %c512_i32 : i32
    %c256_i32 = arith.constant 256 : i32
    %5 = arith.muli %arg1, %c256_i32 : i32
    %6 = arith.addi %4, %5 : i32
    %7 = tpu.iota {dimensions = array<i32: 0>} : vector<2x256xi32>
    %8 = tpu.iota {dimensions = array<i32: 1>} : vector<2x256xi32>
    %c256_i32_3 = arith.constant 256 : i32
    %9 = vector.broadcast %c256_i32_3 : i32 to vector<2x256xi32>
    %10 = arith.muli %7, %9 : vector<2x256xi32>
    %11 = vector.broadcast %6 : i32 to vector<2x256xi32>
    %12 = arith.addi %11, %10 : vector<2x256xi32>
    %13 = arith.addi %12, %8 : vector<2x256xi32>
    %c0_4 = arith.constant 0 : index
    %14 = memref.load %arg2[%c0_4] : memref<1xi32, #tpu.memory_space<smem>>
    %c-1640531527_i32 = arith.constant -1640531527 : i32
    %15 = arith.muli %14, %c-1640531527_i32 : i32
    %16 = vector.broadcast %15 : i32 to vector<2x256xi32>
    %17 = arith.xori %13, %16 : vector<2x256xi32>
    %c2146121005_i32 = arith.constant 2146121005 : i32
    %18 = vector.broadcast %c2146121005_i32 : i32 to vector<2x256xi32>
    %19 = arith.muli %17, %18 : vector<2x256xi32>
    %c15_i32 = arith.constant 15 : i32
    %20 = vector.broadcast %c15_i32 : i32 to vector<2x256xi32>
    %21 = arith.shrui %19, %20 : vector<2x256xi32>
    %22 = arith.xori %19, %21 : vector<2x256xi32>
    %c-2073254261_i32 = arith.constant -2073254261 : i32
    %23 = vector.broadcast %c-2073254261_i32 : i32 to vector<2x256xi32>
    %24 = arith.muli %22, %23 : vector<2x256xi32>
    %c16_i32 = arith.constant 16 : i32
    %25 = vector.broadcast %c16_i32 : i32 to vector<2x256xi32>
    %26 = arith.shrui %24, %25 : vector<2x256xi32>
    %27 = arith.xori %24, %26 : vector<2x256xi32>
    %c8_i32 = arith.constant 8 : i32
    %28 = vector.broadcast %c8_i32 : i32 to vector<2x256xi32>
    %29 = arith.shrui %27, %28 : vector<2x256xi32>
    %c1677722_i32 = arith.constant 1677722 : i32
    %30 = vector.broadcast %c1677722_i32 : i32 to vector<2x256xi32>
    %31 = arith.cmpi uge, %29, %30 : vector<2x256xi32>
    %cst = arith.constant 1.11111116 : f32
    %32 = vector.broadcast %cst : f32 to vector<2x256xf32>
    %33 = arith.mulf %3, %32 : vector<2x256xf32>
    %cst_5 = arith.constant 0.000000e+00 : f32
    %34 = vector.broadcast %cst_5 : f32 to vector<2x256xf32>
    %35 = arith.select %31, %33, %34 : vector<2x256xi1>, vector<2x256xf32>
    %c0_6 = arith.constant 0 : index
    %c0_7 = arith.constant 0 : index
    %36 = vector.load %arg5[%c0_6, %c0_7] : memref<2x256xf32, #tpu.memory_space<vmem>>, vector<2x256xf32>
    tpu.vector_store %arg5[%c0_6, %c0_7], %35 {strides = array<i32>} : memref<2x256xf32, #tpu.memory_space<vmem>>, vector<2x256xf32>,
    return
  }
  func.func @transform_0(%arg0: i32, %arg1: i32, %arg2: memref<1xi32, #tpu.memory_space<smem>>) -> (i32, i32) {
    %c0_i32 = arith.constant 0 : i32
    return %arg0, %arg1 : i32, i32
  }
  func.func @transform_1(%arg0: i32, %arg1: i32, %arg2: memref<1xi32, #tpu.memory_space<smem>>) -> (i32, i32) {
    %c0_i32 = arith.constant 0 : i32
    %c0_i32_0 = arith.constant 0 : i32
    return %c0_i32, %arg1 : i32, i32
  }
  func.func @transform_2(%arg0: i32, %arg1: i32, %arg2: memref<1xi32, #tpu.memory_space<smem>>) -> (i32, i32) {
    %c0_i32 = arith.constant 0 : i32
    return %arg0, %arg1 : i32, i32
  }
}

</mosaic_0001>

<llo_original>
// kernel: tpu_custom_call.1
$region0: #{tpu_custom_call.1}
  #allocation0 [shape = 'u32[]', space=smem, size = 0x4, offset = 0x4, fixed_abs, tag = 'smem constant byte address 0x4 - core index']
  #allocation1 [shape = 'u32[144,128]{1,0:T(1,128)}', space=vmem, size = 0x12000, scoped, tag = 'internal scratch']
  #allocation2 [shape = 's32[1]{0}', space=sflag, size = 0x4, scoped, tag = 'scoped memory for tpu_custom_call.1']
  #allocation3 [shape = 's32[1]{0:T(128)S(6)}', space=smem, size = 0x200, scoped, tag = 'prefetched SMEM operand 0']
  %s0 = inlined_call_operand.<no memory space> [shape: s32[1], index: 0, kind: input, shape index: {}]
  %s1 = inlined_call_operand.hbm [shape: f32[2,256], index: 1, kind: input, shape index: {}]
  %s2 = inlined_call_operand.vmem [shape: f32[1,256], index: 2, kind: input, shape index: {}]
  %s3 = inlined_call_operand.hbm [shape: f32[2,256], index: 3, kind: output, shape index: {}]
  %s4 = sld [smem:[#allocation0]]
  $region22: #{tpu_custom_call.1} parent=0
    _
  %s6 = ssub.s32 1, %s4
  %s7 = scalar_select 0, %s6, %s4
  %8 = sst [smem:[#allocation3]] %s0
  $region1: #{tpu_custom_call.1} parent=0
    #allocation4 [shape = 'u8[2048]{0}', space=vmem, size = 0x800, scoped, tag = 'input window, operand 1, single buffered']
    #allocation5 [shape = 's32[1]{0}', space=sflag, size = 0x4, scoped, tag = 'scoped memory for tpu_custom_call.1']
    #allocation6 [shape = 's32[1]{0}', space=sflag, size = 0x4, scoped, tag = 'scoped memory for tpu_custom_call.1']
    #allocation7 [shape = 'u8[2048]{0}', space=vmem, size = 0x800, scoped, tag = 'output window, operand 0, single buffered']
    %9 = vsyncpa [#allocation5], 0
    %10 = vsyncpa [#allocation6], 0
    // Predicated region
    $region2: #{tpu_custom_call.1} parent=1 // pred_check
      _
    $region3: #{tpu_custom_call.1} parent=1 // pred_check_branch
      %12 = sbr.rel (0) target = $region5
    $region4: #{tpu_custom_call.1} parent=1 // pred_region
      %s14 = ssub.s32 64, 64
      %15 = vsyncadd [#allocation5], %s14
      %s17 = sshll.u32 [#allocation4], 4
      %s18 = int_to_ptr.vmem [resolvable:$true] %s17
      %20 = dma.hbm_to_vmem [thread:$0]  %s1, 64, %s18, [#allocation5]
    $region5: #{tpu_custom_call.1} parent=1 // pred_fallthru
      _
    // Predicated region
    $region6: #{tpu_custom_call.1} parent=1 // pred_check
      _
    $region7: #{tpu_custom_call.1} parent=1 // pred_check_branch
      %22 = sbr.rel (0) target = $region9
    $region8: #{tpu_custom_call.1} parent=1 // pred_region
      _
    $region9: #{tpu_custom_call.1} parent=1 // pred_fallthru
      _
    // Predicated region
    $region10: #{tpu_custom_call.1} parent=1 // pred_check
      _
    $region11: #{tpu_custom_call.1} parent=1 // pred_check_branch
      %24 = sbr.rel (0) target = $region13
    $region12: #{tpu_custom_call.1} parent=1 // pred_region
      %25 = dma.done [#allocation5], 64
    $region13: #{tpu_custom_call.1} parent=1 // pred_fallthru
      _
    %v26 = vld [vmem:[#allocation4] sm:$0xf]
    %v27 = vld [vmem:[%s2] sm:$0x3]
    %v29 = vlaneseq
    %v30 = vshrl.u32 %v29, 7
    %v31 = vsub.s32 0, %v30
    %v32 = vrot.slane %v27, %v31
    %v33 = vlaneseq
    %v34 = vshrl.u32 %v33, 7
    %v35 = vsub.s32 1, %v34
    %v36 = vrot.slane %v27, %v35
    %v37 = vcombine.low %v32, %v36
    %v39 = vunpack.c.l.s4 1983009808
    %v40 = vunpack.c.0.s8 %v39
    %v41 = vlaneseq
    %v42 = vshrl.u32 %v41, 7
    %v43 = vsub.s32 %v40, %v42
    %v44 = vrot.slane %v37, %v43
    %v46 = vadd.f32 %v26, %v44
    %s47 = smul.u32 0, 512
    %s48 = smul.u32 0, 256
    %s49 = sadd.s32 %s47, %s48
    %v50 = vlaneseq
    %v51 = vshrl.u32 %v50, 7
    %v52 = vlaneseq
    %v53 = vand.u32 %v52, 127
    %v54 = vadd.s32 %v53, 128
    %v55 = vmul.u32 %v51, 256
    %v56 = vstv %s49
    %v57 = vadd.s32 %v56, %v55
    %v58 = vadd.s32 %v57, %v53
    %v59 = vadd.s32 %v57, %v54
    %s60 = sld [smem:[#allocation3]]
    %s61 = smul.u32 %s60, 2654435769
    %v62 = vstv %s61
    %v63 = vxor.u32 %v58, %v62
    %v64 = vxor.u32 %v59, %v62
    %v65 = vmul.u32 %v63, 2146121005
    %v66 = vmul.u32 %v64, 2146121005
    %v67 = vshrl.u32 %v65, 15
    %v68 = vshrl.u32 %v66, 15
    %v69 = vxor.u32 %v65, %v67
    %v70 = vxor.u32 %v66, %v68
    %v71 = vmul.u32 %v69, 2221713035
    %v72 = vmul.u32 %v70, 2221713035
    %v73 = vshrl.u32 %v71, 16
    %v74 = vshrl.u32 %v72, 16
    %v75 = vxor.u32 %v71, %v73
    %v76 = vxor.u32 %v72, %v74
    %v77 = vshrl.u32 %v75, 8
    %v78 = vshrl.u32 %v76, 8
    %vm79 = vcmp.ge.u32.totalorder %v77, 1677722
    %vm80 = vcmp.ge.u32.totalorder %v78, 1677722
    %v81 = vmul.f32 %v46, 1.1111112
    %v84 = vunpack.c.l.s4 1983009808
    %v85 = vunpack.c.0.s8 %v84
    %v86 = vlaneseq
    %v87 = vshrl.u32 %v86, 7
    %v88 = vsub.s32 %v85, %v87
    %v89 = vrot.slane %v81, %v88
    %v90 = vcombine.high %v89, %v89
    %v93 = vsel %vm79, %v89, 0.0
    %v94 = vsel %vm80, %v90, 0.0
    %v97 = vcombine.low %v93, %v94
    %v99 = vunpack.c.l.s4 1983009808
    %v100 = vunpack.c.0.s8 %v99
    %v101 = vlaneseq
    %v102 = vshrl.u32 %v101, 7
    %v103 = vsub.s32 %v100, %v102
    %v104 = vrot.slane %v97, %v103
    %106 = vst [vmem:[#allocation7] sm:$0xf] %v104
    // Predicated region
    $region14: #{tpu_custom_call.1} parent=1 // pred_check
      _
    $region15: #{tpu_custom_call.1} parent=1 // pred_check_branch
      %108 = sbr.rel (0) target = $region17
    $region16: #{tpu_custom_call.1} parent=1 // pred_region
      %s110 = ssub.s32 64, 64
      %111 = vsyncadd [#allocation6], %s110
      %s113 = sshll.u32 [#allocation7], 4
      %s114 = int_to_ptr.vmem [resolvable:$true] %s113
      %116 = dma.vmem_to_hbm [thread:$0]  %s114, 64, %s3, [#allocation6]
    $region17: #{tpu_custom_call.1} parent=1 // pred_fallthru
      _
    // Predicated region
    $region18: #{tpu_custom_call.1} parent=1 // pred_check
      _
    $region19: #{tpu_custom_call.1} parent=1 // pred_check_branch
      %118 = sbr.rel (0) target = $region21
    $region20: #{tpu_custom_call.1} parent=1 // pred_region
      %119 = dma.done [#allocation6], 64
    $region21: #{tpu_custom_call.1} parent=1 // pred_fallthru
      _
    %120 = vsyncpa [#allocation5], 1
    %121 = vsyncpa [#allocation6], 1

</llo_original>
